<compile_context>
chip_gen: v7x
topology: tpu7x:2x2x1
jax: 0.10.0
libtpu: 0.0.40
codegen_flags: <defaults>
</compile_context>

<pallas_src>
import jax
import jax.numpy as jnp
from jax import lax
from jax.experimental import pallas as pl
from jax.experimental.pallas import tpu as pltpu


def _shift_rows(a, dy):
    """out[y, :] = a[y + dy, :] for rows in range, 0 outside (3x3 vertical halo)."""
    if dy == 0:
        return a
    H = a.shape[0]
    rolled = pltpu.roll(a, shift=(-dy) % H, axis=0)        # XLU sublane rotate
    rows = lax.broadcasted_iota(jnp.int32, a.shape, 0)
    valid = (rows < H - dy) if dy > 0 else (rows >= -dy)
    return jnp.where(valid, rolled, jnp.zeros_like(rolled))


def _double_conv_kernel(x_ref, m1_ref, b1_ref, m2_ref, b2_ref, o_ref):
    # x_ref : (1, H, W*Cin)        f32   one image, width folded into lanes
    # m1_ref: (3, W*Cin, W*Cout)   bf16  conv1 block-Toeplitz weights (per dy)
    # b1_ref: (1, W*Cout)          f32   conv1 bias tiled over W
    # m2_ref: (3, W*Cout, W*Cout)  bf16  conv2 block-Toeplitz weights (per dy)
    # b2_ref: (1, W*Cout)          f32
    # o_ref : (1, H, W*Cout)       f32   lane-dense output slab
    H = x_ref.shape[1]
    WCout = o_ref.shape[2]

    x = x_ref[0]                                            # (H, W*Cin) f32

    # ---- conv1: 3 vertical taps; horizontal taps folded into the Toeplitz K ----
    acc = jnp.broadcast_to(b1_ref[...], (H, WCout))         # bias-init, f32
    for dy in (-1, 0, 1):
        lhs = _shift_rows(x, dy).astype(jnp.bfloat16)       # bf16 MXU feed
        acc = acc + jnp.dot(lhs, m1_ref[dy + 1],
                            preferred_element_type=jnp.float32)
    a1 = jnp.maximum(acc, 0.0)                              # (H, W*Cout) f32, in-register

    # ---- conv2: same structure, reading the in-register intermediate ----
    acc = jnp.broadcast_to(b2_ref[...], (H, WCout))
    for dy in (-1, 0, 1):
        lhs = _shift_rows(a1, dy).astype(jnp.bfloat16)
        acc = acc + jnp.dot(lhs, m2_ref[dy + 1],
                            preferred_element_type=jnp.float32)
    o_ref[0] = jnp.maximum(acc, 0.0).astype(o_ref.dtype)


def _toeplitz_weights(w_oihw, W):
    """OIHW 3x3 conv weights -> (3, W*Cin, W*Cout) block-Toeplitz (one per ky).

    M[ky][(x+dx)*Cin + ci, x*Cout + co] = w[co, ci, ky, dx+1], zero elsewhere,
    so (H, W*Cin) @ M[ky] applies all three horizontal taps of kernel row ky
    with the padding=1 zero border on x handled implicitly.
    """
    w_t = jnp.transpose(w_oihw, (2, 3, 1, 0))               # (ky, kx, Cin, Cout)
    mats = []
    for ky in range(3):
        m = 0.0
        for kx in range(3):
            dx = kx - 1
            m = m + jnp.kron(jnp.eye(W, k=-dx, dtype=w_t.dtype), w_t[ky, kx])
        mats.append(m)
    return jnp.stack(mats, axis=0)                          # (3, W*Cin, W*Cout)


def double_conv_nhwc(x_nhwc, w1_oihw, b1, w2_oihw, b2):
    """x_nhwc: (B, H, W, Cin) f32; weights in PyTorch OIHW layout."""
    B, H, W, Cin = x_nhwc.shape
    Cout = w1_oihw.shape[0]
    WCin, WCout = W * Cin, W * Cout

    x2 = x_nhwc.reshape(B, H, WCin)                          # lane = x*Cin + ci
    m1 = _toeplitz_weights(w1_oihw, W).astype(jnp.bfloat16)  # (3, WCin, WCout)
    m2 = _toeplitz_weights(w2_oihw, W).astype(jnp.bfloat16)  # (3, WCout, WCout)
    b1r = jnp.tile(b1.astype(jnp.float32), W).reshape(1, WCout)
    b2r = jnp.tile(b2.astype(jnp.float32), W).reshape(1, WCout)

    out2 = pl.pallas_call(
        _double_conv_kernel,
        out_shape=jax.ShapeDtypeStruct((B, H, WCout), jnp.float32),
        grid_spec=pltpu.PrefetchScalarGridSpec(
            num_scalar_prefetch=0,
            grid=(B,),   # for large B, block several images per step to grow M
            in_specs=[
                pl.BlockSpec((1, H, WCin), lambda b: (b, 0, 0)),
                pl.BlockSpec((3, WCin, WCout), lambda b: (0, 0, 0)),
                pl.BlockSpec((1, WCout), lambda b: (0, 0)),
                pl.BlockSpec((3, WCout, WCout), lambda b: (0, 0, 0)),
                pl.BlockSpec((1, WCout), lambda b: (0, 0)),
            ],
            out_specs=pl.BlockSpec((1, H, WCout), lambda b: (b, 0, 0)),
        ),
        compiler_params=pltpu.CompilerParams(
            dimension_semantics=("parallel",)),
    )(x2, m1, b1r, m2, b2r)

    return out2.reshape(B, H, W, Cout)


@jax.jit
def double_conv_nchw(x_nchw, w1_oihw, b1, w2_oihw, b2):
    """PyTorch-convention entry point: x (B, Cin, H, W), weights OIHW."""
    x_nhwc = jnp.transpose(x_nchw, (0, 2, 3, 1))
    out_nhwc = double_conv_nhwc(x_nhwc, w1_oihw, b1, w2_oihw, b2)
    return jnp.transpose(out_nhwc, (0, 3, 1, 2))


def _reference_nchw(x, w1, b1, w2, b2):
    dn = lax.conv_dimension_numbers(x.shape, w1.shape, ("NCHW", "OIHW", "NCHW"))
    y = lax.conv_general_dilated(x, w1, (1, 1), ((1, 1), (1, 1)), dimension_numbers=dn)
    y = jnp.maximum(y + b1[None, :, None, None], 0.0)
    z = lax.conv_general_dilated(y, w2, (1, 1), ((1, 1), (1, 1)), dimension_numbers=dn)
    return jnp.maximum(z + b2[None, :, None, None], 0.0)


if __name__ == "__main__":
    key = jax.random.PRNGKey(0)
    B, Cin, Cout, H, W = 2, 4, 8, 16, 16

    k0, k1, k2, k3, k4 = jax.random.split(key, 5)
    x = jax.random.normal(k0, (B, Cin, H, W), jnp.float32)
    # deterministic "Kaiming-ish" init (shapes match nn.Conv2d(in, out, 3, padding=1))
    w1 = jax.random.normal(k1, (Cout, Cin, 3, 3), jnp.float32) * (2.0 / (Cin * 9)) ** 0.5
    b1 = jax.random.normal(k2, (Cout,), jnp.float32) * 0.01
    w2 = jax.random.normal(k3, (Cout, Cout, 3, 3), jnp.float32) * (2.0 / (Cout * 9)) ** 0.5
    b2 = jax.random.normal(k4, (Cout,), jnp.float32) * 0.01

    out = jax.block_until_ready(double_conv_nchw(x, w1, b1, w2, b2))
    ref = _reference_nchw(x, w1, b1, w2, b2)

    assert out.shape == (B, Cout, H, W)
    # bf16 MXU feed with f32 accumulation -> slightly looser tolerance than pure f32.
    assert jnp.allclose(out, ref, atol=5e-2, rtol=5e-2), (
        f"mismatch vs reference, max abs err = {float(jnp.max(jnp.abs(out - ref))):.4f}")
    print("KERNEL_OK")
</pallas_src>

<mosaic_0001>
module attributes {stable_mosaic.version = 11 : i64} {
  func.func @_double_conv_kernel(%arg0: i32, %arg1: memref<1x16x64xf32, #tpu.memory_space<vmem>>, %arg2: memref<3x64x128xbf16, #tpu.memory_space<vmem>>, %arg3: memref<1x128xf32, #tpu.memory_space<vmem>>, %arg4: memref<3x128x128xbf16, #tpu.memory_space<vmem>>, %arg5: memref<1x128xf32, #tpu.memory_space<vmem>>, %arg6: memref<1x16x128xf32, #tpu.memory_space<vmem>>) attributes {dimension_semantics = [#tpu.dimension_semantics<parallel>], iteration_bounds = array<i64: 2>, scalar_prefetch = 0 : i64, scratch_operands = 0 : i64, tpu.core_type = #tpu.core_type<tc>, window_params = [{transform_indices = @transform_0, window_bounds = array<i64: 1, 16, 64>}, {pipeline_mode = #tpu.pipeline_mode<synchronous>, transform_indices = @transform_1, window_bounds = array<i64: 3, 64, 128>}, {pipeline_mode = #tpu.pipeline_mode<synchronous>, transform_indices = @transform_2, window_bounds = array<i64: 1, 128>}, {pipeline_mode = #tpu.pipeline_mode<synchronous>, transform_indices = @transform_3, window_bounds = array<i64: 3, 128, 128>}, {pipeline_mode = #tpu.pipeline_mode<synchronous>, transform_indices = @transform_4, window_bounds = array<i64: 1, 128>}, {transform_indices = @transform_5, window_bounds = array<i64: 1, 16, 128>}]} {
    %c0 = arith.constant 0 : index
    %c0_0 = arith.constant 0 : index
    %c0_1 = arith.constant 0 : index
    %0 = vector.load %arg1[%c0, %c0_0, %c0_1] : memref<1x16x64xf32, #tpu.memory_space<vmem>>, vector<1x16x64xf32>
    %1 = vector.shape_cast %0 : vector<1x16x64xf32> to vector<16x64xf32>
    %c0_2 = arith.constant 0 : index
    %c0_3 = arith.constant 0 : index
    %2 = vector.load %arg3[%c0_2, %c0_3] : memref<1x128xf32, #tpu.memory_space<vmem>>, vector<1x128xf32>
    %3 = vector.shape_cast %2 : vector<1x128xf32> to vector<1x128xf32>
    %4 = vector.broadcast %3 : vector<1x128xf32> to vector<16x128xf32>
    %c1_i32 = arith.constant 1 : i32
    %5 = tpu.dynamic_rotate %1 by %c1_i32 dim 0 : vector<16x64xf32>, i32 -> vector<16x64xf32>
    %6 = tpu.iota {dimensions = array<i32: 0>} : vector<16x64xi32>
    %c1_i32_4 = arith.constant 1 : i32
    %7 = vector.broadcast %c1_i32_4 : i32 to vector<16x64xi32>
    %8 = arith.cmpi sge, %6, %7 : vector<16x64xi32>
    %cst = arith.constant 0.000000e+00 : f32
    %9 = vector.broadcast %cst : f32 to vector<16x64xf32>
    %10 = arith.select %8, %5, %9 : vector<16x64xi1>, vector<16x64xf32>
    %11 = arith.truncf %10 : vector<16x64xf32> to vector<16x64xbf16>
    %c0_5 = arith.constant 0 : index
    %c0_6 = arith.constant 0 : index
    %c0_7 = arith.constant 0 : index
    %12 = vector.load %arg2[%c0_5, %c0_6, %c0_7] : memref<3x64x128xbf16, #tpu.memory_space<vmem>>, vector<1x64x128xbf16>
    %13 = vector.shape_cast %12 : vector<1x64x128xbf16> to vector<64x128xbf16>
    %cst_8 = arith.constant dense<0.000000e+00> : vector<16x128xf32>
    %14 = tpu.matmul %11, %13, %cst_8 {dimension_numbers = #tpu.dot_dimension_numbers<[1], [0], [0], [1], [0, 0, 1, 1], [], []>} : vector<16x64xbf16>, vector<64x128xbf16>, vector<16x128xf32> -> vector<16x128xf32>
    %15 = arith.addf %4, %14 : vector<16x128xf32>
    %16 = arith.truncf %1 : vector<16x64xf32> to vector<16x64xbf16>
    %c1 = arith.constant 1 : index
    %c0_9 = arith.constant 0 : index
    %c0_10 = arith.constant 0 : index
    %17 = vector.load %arg2[%c1, %c0_9, %c0_10] : memref<3x64x128xbf16, #tpu.memory_space<vmem>>, vector<1x64x128xbf16>
    %18 = vector.shape_cast %17 : vector<1x64x128xbf16> to vector<64x128xbf16>
    %cst_11 = arith.constant dense<0.000000e+00> : vector<16x128xf32>
    %19 = tpu.matmul %16, %18, %cst_11 {dimension_numbers = #tpu.dot_dimension_numbers<[1], [0], [0], [1], [0, 0, 1, 1], [], []>} : vector<16x64xbf16>, vector<64x128xbf16>, vector<16x128xf32> -> vector<16x128xf32>
    %20 = arith.addf %15, %19 : vector<16x128xf32>
    %c15_i32 = arith.constant 15 : i32
    %21 = tpu.dynamic_rotate %1 by %c15_i32 dim 0 : vector<16x64xf32>, i32 -> vector<16x64xf32>
    %22 = tpu.iota {dimensions = array<i32: 0>} : vector<16x64xi32>
    %c15_i32_12 = arith.constant 15 : i32
    %23 = vector.broadcast %c15_i32_12 : i32 to vector<16x64xi32>
    %24 = arith.cmpi slt, %22, %23 : vector<16x64xi32>
    %cst_13 = arith.constant 0.000000e+00 : f32
    %25 = vector.broadcast %cst_13 : f32 to vector<16x64xf32>
    %26 = arith.select %24, %21, %25 : vector<16x64xi1>, vector<16x64xf32>
    %27 = arith.truncf %26 : vector<16x64xf32> to vector<16x64xbf16>
    %c2 = arith.constant 2 : index
    %c0_14 = arith.constant 0 : index
    %c0_15 = arith.constant 0 : index
    %28 = vector.load %arg2[%c2, %c0_14, %c0_15] : memref<3x64x128xbf16, #tpu.memory_space<vmem>>, vector<1x64x128xbf16>
    %29 = vector.shape_cast %28 : vector<1x64x128xbf16> to vector<64x128xbf16>
    %cst_16 = arith.constant dense<0.000000e+00> : vector<16x128xf32>
    %30 = tpu.matmul %27, %29, %cst_16 {dimension_numbers = #tpu.dot_dimension_numbers<[1], [0], [0], [1], [0, 0, 1, 1], [], []>} : vector<16x64xbf16>, vector<64x128xbf16>, vector<16x128xf32> -> vector<16x128xf32>
    %31 = arith.addf %20, %30 : vector<16x128xf32>
    %cst_17 = arith.constant 0.000000e+00 : f32
    %32 = vector.broadcast %cst_17 : f32 to vector<16x128xf32>
    %33 = arith.maximumf %31, %32 : vector<16x128xf32>
    %c0_18 = arith.constant 0 : index
    %c0_19 = arith.constant 0 : index
    %34 = vector.load %arg5[%c0_18, %c0_19] : memref<1x128xf32, #tpu.memory_space<vmem>>, vector<1x128xf32>
    %35 = vector.shape_cast %34 : vector<1x128xf32> to vector<1x128xf32>
    %36 = vector.broadcast %35 : vector<1x128xf32> to vector<16x128xf32>
    %c1_i32_20 = arith.constant 1 : i32
    %37 = tpu.dynamic_rotate %33 by %c1_i32_20 dim 0 : vector<16x128xf32>, i32 -> vector<16x128xf32>
    %38 = tpu.iota {dimensions = array<i32: 0>} : vector<16x128xi32>
    %c1_i32_21 = arith.constant 1 : i32
    %39 = vector.broadcast %c1_i32_21 : i32 to vector<16x128xi32>
    %40 = arith.cmpi sge, %38, %39 : vector<16x128xi32>
    %cst_22 = arith.constant 0.000000e+00 : f32
    %41 = vector.broadcast %cst_22 : f32 to vector<16x128xf32>
    %42 = arith.select %40, %37, %41 : vector<16x128xi1>, vector<16x128xf32>
    %43 = arith.truncf %42 : vector<16x128xf32> to vector<16x128xbf16>
    %c0_23 = arith.constant 0 : index
    %c0_24 = arith.constant 0 : index
    %c0_25 = arith.constant 0 : index
    %44 = vector.load %arg4[%c0_23, %c0_24, %c0_25] : memref<3x128x128xbf16, #tpu.memory_space<vmem>>, vector<1x128x128xbf16>
    %45 = vector.shape_cast %44 : vector<1x128x128xbf16> to vector<128x128xbf16>
    %cst_26 = arith.constant dense<0.000000e+00> : vector<16x128xf32>
    %46 = tpu.matmul %43, %45, %cst_26 {dimension_numbers = #tpu.dot_dimension_numbers<[1], [0], [0], [1], [0, 0, 1, 1], [], []>} : vector<16x128xbf16>, vector<128x128xbf16>, vector<16x128xf32> -> vector<16x128xf32>
    %47 = arith.addf %36, %46 : vector<16x128xf32>
    %48 = arith.truncf %33 : vector<16x128xf32> to vector<16x128xbf16>
    %c1_27 = arith.constant 1 : index
    %c0_28 = arith.constant 0 : index
    %c0_29 = arith.constant 0 : index
    %49 = vector.load %arg4[%c1_27, %c0_28, %c0_29] : memref<3x128x128xbf16, #tpu.memory_space<vmem>>, vector<1x128x128xbf16>
    %50 = vector.shape_cast %49 : vector<1x128x128xbf16> to vector<128x128xbf16>
    %cst_30 = arith.constant dense<0.000000e+00> : vector<16x128xf32>
    %51 = tpu.matmul %48, %50, %cst_30 {dimension_numbers = #tpu.dot_dimension_numbers<[1], [0], [0], [1], [0, 0, 1, 1], [], []>} : vector<16x128xbf16>, vector<128x128xbf16>, vector<16x128xf32> -> vector<16x128xf32>
    %52 = arith.addf %47, %51 : vector<16x128xf32>
    %c15_i32_31 = arith.constant 15 : i32
    %53 = tpu.dynamic_rotate %33 by %c15_i32_31 dim 0 : vector<16x128xf32>, i32 -> vector<16x128xf32>
    %54 = tpu.iota {dimensions = array<i32: 0>} : vector<16x128xi32>
    %c15_i32_32 = arith.constant 15 : i32
    %55 = vector.broadcast %c15_i32_32 : i32 to vector<16x128xi32>
    %56 = arith.cmpi slt, %54, %55 : vector<16x128xi32>
    %cst_33 = arith.constant 0.000000e+00 : f32
    %57 = vector.broadcast %cst_33 : f32 to vector<16x128xf32>
    %58 = arith.select %56, %53, %57 : vector<16x128xi1>, vector<16x128xf32>
    %59 = arith.truncf %58 : vector<16x128xf32> to vector<16x128xbf16>
    %c2_34 = arith.constant 2 : index
    %c0_35 = arith.constant 0 : index
    %c0_36 = arith.constant 0 : index
    %60 = vector.load %arg4[%c2_34, %c0_35, %c0_36] : memref<3x128x128xbf16, #tpu.memory_space<vmem>>, vector<1x128x128xbf16>
    %61 = vector.shape_cast %60 : vector<1x128x128xbf16> to vector<128x128xbf16>
    %cst_37 = arith.constant dense<0.000000e+00> : vector<16x128xf32>
    %62 = tpu.matmul %59, %61, %cst_37 {dimension_numbers = #tpu.dot_dimension_numbers<[1], [0], [0], [1], [0, 0, 1, 1], [], []>} : vector<16x128xbf16>, vector<128x128xbf16>, vector<16x128xf32> -> vector<16x128xf32>
    %63 = arith.addf %52, %62 : vector<16x128xf32>
    %cst_38 = arith.constant 0.000000e+00 : f32
    %64 = vector.broadcast %cst_38 : f32 to vector<16x128xf32>
    %65 = arith.maximumf %63, %64 : vector<16x128xf32>
    %c0_39 = arith.constant 0 : index
    %c0_40 = arith.constant 0 : index
    %c0_41 = arith.constant 0 : index
    %66 = vector.load %arg6[%c0_39, %c0_40, %c0_41] : memref<1x16x128xf32, #tpu.memory_space<vmem>>, vector<1x16x128xf32>
    %67 = vector.shape_cast %66 : vector<1x16x128xf32> to vector<16x128xf32>
    %68 = vector.shape_cast %65 : vector<16x128xf32> to vector<1x16x128xf32>
    tpu.vector_store %arg6[%c0_39, %c0_40, %c0_41], %68 {strides = array<i32>} : memref<1x16x128xf32, #tpu.memory_space<vmem>>, vector<1x16x128xf32>,
    return
  }
  func.func @transform_0(%arg0: i32) -> (i32, i32, i32) {
    %c0_i32 = arith.constant 0 : i32
    %c0_i32_0 = arith.constant 0 : i32
    %c0_i32_1 = arith.constant 0 : i32
    return %arg0, %c0_i32, %c0_i32_0 : i32, i32, i32
  }
  func.func @transform_1(%arg0: i32) -> (i32, i32, i32) {
    %c0_i32 = arith.constant 0 : i32
    %c0_i32_0 = arith.constant 0 : i32
    %c0_i32_1 = arith.constant 0 : i32
    %c0_i32_2 = arith.constant 0 : i32
    return %c0_i32, %c0_i32_0, %c0_i32_1 : i32, i32, i32
  }
  func.func @transform_2(%arg0: i32) -> (i32, i32) {
    %c0_i32 = arith.constant 0 : i32
    %c0_i32_0 = arith.constant 0 : i32
    %c0_i32_1 = arith.constant 0 : i32
    return %c0_i32, %c0_i32_0 : i32, i32
  }
  func.func @transform_3(%arg0: i32) -> (i32, i32, i32) {
    %c0_i32 = arith.constant 0 : i32
    %c0_i32_0 = arith.constant 0 : i32
    %c0_i32_1 = arith.constant 0 : i32
    %c0_i32_2 = arith.constant 0 : i32
    return %c0_i32, %c0_i32_0, %c0_i32_1 : i32, i32, i32
  }
  func.func @transform_4(%arg0: i32) -> (i32, i32) {
    %c0_i32 = arith.constant 0 : i32
    %c0_i32_0 = arith.constant 0 : i32
    %c0_i32_1 = arith.constant 0 : i32
    return %c0_i32, %c0_i32_0 : i32, i32
  }
  func.func @transform_5(%arg0: i32) -> (i32, i32, i32) {
    %c0_i32 = arith.constant 0 : i32
    %c0_i32_0 = arith.constant 0 : i32
    %c0_i32_1 = arith.constant 0 : i32
    return %arg0, %c0_i32, %c0_i32_0 : i32, i32, i32
  }
}

</mosaic_0001>

<llo_original>
// kernel: tile.13
$region0: #{tile.13}
  #allocation0 [shape = 's32[1]{0}', space=sflag, size = 0x4, scoped, tag = 'scoped memory for tile.13']
  %s0 = inlined_call_operand.vmem [shape: f32[8], index: 0, kind: input, shape index: {}]
  %s1 = inlined_call_operand.vmem [shape: f32[16,8], index: 1, kind: output, shape index: {}]
  // Predicated region
  $region2: #{tile.13} parent=0 // pred_check
    _
  $region3: #{tile.13} parent=0 // pred_check_branch
    %3 = sbr.rel (0) target = $region5
  $region4: #{tile.13} parent=0 // pred_region
    _
  $region5: #{tile.13} parent=0 // pred_fallthru
    _
  %v4 = vld [vmem:[%s0] ss:$0 sm:$0xff]
  %5 = vst [vmem:[%s1] sm:$0xff] %v4
  %s6 = scalar_lea.vmem %s1, 8
  %7 = vst [vmem:[%s6] sm:$0xff] %v4

// kernel: tile.14
$region0: #{tile.14}
  %s0 = inlined_call_operand.vmem [shape: f32[16,8], index: 0, kind: input, shape index: {}]
  %s1 = inlined_call_operand.vmem [shape: f32[1,128], index: 1, kind: output, shape index: {}]
  $region1: #{tile.14} parent=0
    #allocation0 [shape = 'u8[4096]{0}', space=vmem, size = 0x1000, scoped, tag = 'scoped mem for output reshape']
    %v2 = vld [vmem:[%s0] sm:$0x1]
    %vm3 = vcmask 64512
    %4 = vst.msk [vmem:[#allocation0] sm:$0x1] %vm3, %v2
    %s5 = scalar_lea.vmem %s0, 15
    %v6 = vld [vmem:[%s5] sm:$0x1]
    %7 = vrot.lane.b32.xlu0 %v6, 120
    %v8 = vpop.permute.xlu0 %7
    %vm9 = vcmask 1048512
    %10 = vst.msk [vmem:[#allocation0] sm:$0x1] %vm9, %v8
    %s11 = scalar_lea.vmem %s0, 14
    %v12 = vld [vmem:[%s11] sm:$0x1]
    %13 = vrot.lane.b32.xlu0 %v12, 112
    %v14 = vpop.permute.xlu0 %13
    %vm15 = vcmask 982912
    %16 = vst.msk [vmem:[#allocation0] sm:$0x1] %vm15, %v14
    %s17 = scalar_lea.vmem %s0, 13
    %v18 = vld [vmem:[%s17] sm:$0x1]
    %19 = vrot.lane.b32.xlu0 %v18, 104
    %v20 = vpop.permute.xlu0 %19
    %vm21 = vcmask 917312
    %22 = vst.msk [vmem:[#allocation0] sm:$0x1] %vm21, %v20
    %s23 = scalar_lea.vmem %s0, 12
    %v24 = vld [vmem:[%s23] sm:$0x1]
    %25 = vrot.lane.b32.xlu0 %v24, 96
    %v26 = vpop.permute.xlu0 %25
    %vm27 = vcmask 851712
    %28 = vst.msk [vmem:[#allocation0] sm:$0x1] %vm27, %v26
    %s29 = scalar_lea.vmem %s0, 11
    %v30 = vld [vmem:[%s29] sm:$0x1]
    %31 = vrot.lane.b32.xlu0 %v30, 88
    %v32 = vpop.permute.xlu0 %31
    %vm33 = vcmask 786112
    %34 = vst.msk [vmem:[#allocation0] sm:$0x1] %vm33, %v32
    %s35 = scalar_lea.vmem %s0, 10
    %v36 = vld [vmem:[%s35] sm:$0x1]
    %37 = vrot.lane.b32.xlu0 %v36, 80
    %v38 = vpop.permute.xlu0 %37
    %vm39 = vcmask 720512
    %40 = vst.msk [vmem:[#allocation0] sm:$0x1] %vm39, %v38
    %s41 = scalar_lea.vmem %s0, 9
    %v42 = vld [vmem:[%s41] sm:$0x1]
    %43 = vrot.lane.b32.xlu0 %v42, 72
    %v44 = vpop.permute.xlu0 %43
    %vm45 = vcmask 654912
    %46 = vst.msk [vmem:[#allocation0] sm:$0x1] %vm45, %v44
    %s47 = scalar_lea.vmem %s0, 8
    %v48 = vld [vmem:[%s47] sm:$0x1]
    %49 = vrot.lane.b32.xlu0 %v48, 64
    %v50 = vpop.permute.xlu0 %49
    %vm51 = vcmask 589312
    %52 = vst.msk [vmem:[#allocation0] sm:$0x1] %vm51, %v50
    %s53 = scalar_lea.vmem %s0, 7
    %v54 = vld [vmem:[%s53] sm:$0x1]
    %55 = vrot.lane.b32.xlu0 %v54, 56
    %v56 = vpop.permute.xlu0 %55
    %vm57 = vcmask 523712
    %58 = vst.msk [vmem:[#allocation0] sm:$0x1] %vm57, %v56
    %s59 = scalar_lea.vmem %s0, 6
    %v60 = vld [vmem:[%s59] sm:$0x1]
    %61 = vrot.lane.b32.xlu0 %v60, 48
    %v62 = vpop.permute.xlu0 %61
    %vm63 = vcmask 458112
    %64 = vst.msk [vmem:[#allocation0] sm:$0x1] %vm63, %v62
    %s65 = scalar_lea.vmem %s0, 5
    %v66 = vld [vmem:[%s65] sm:$0x1]
    %67 = vrot.lane.b32.xlu0 %v66, 40
    %v68 = vpop.permute.xlu0 %67
    %vm69 = vcmask 392512
    %70 = vst.msk [vmem:[#allocation0] sm:$0x1] %vm69, %v68
    %s71 = scalar_lea.vmem %s0, 4
    %v72 = vld [vmem:[%s71] sm:$0x1]
    %73 = vrot.lane.b32.xlu0 %v72, 32
    %v74 = vpop.permute.xlu0 %73
    %vm75 = vcmask 326912
    %76 = vst.msk [vmem:[#allocation0] sm:$0x1] %vm75, %v74
    %s77 = scalar_lea.vmem %s0, 3
    %v78 = vld [vmem:[%s77] sm:$0x1]
    %79 = vrot.lane.b32.xlu0 %v78, 24
    %v80 = vpop.permute.xlu0 %79
    %vm81 = vcmask 261312
    %82 = vst.msk [vmem:[#allocation0] sm:$0x1] %vm81, %v80
    %s83 = scalar_lea.vmem %s0, 2
    %v84 = vld [vmem:[%s83] sm:$0x1]
    %85 = vrot.lane.b32.xlu0 %v84, 16
    %v86 = vpop.permute.xlu0 %85
    %vm87 = vcmask 195712
    %88 = vst.msk [vmem:[#allocation0] sm:$0x1] %vm87, %v86
    %s89 = scalar_lea.vmem %s0, 1
    %v90 = vld [vmem:[%s89] sm:$0x1]
    %91 = vrot.lane.b32.xlu0 %v90, 8
    %v92 = vpop.permute.xlu0 %91
    %vm93 = vcmask 130112
    %94 = vst.msk [vmem:[#allocation0] sm:$0x1] %vm93, %v92
    %s96 = sshllo.u32 0, 1
    %v98 = vld [vmem:[#allocation0] sm:%s96]
    %s99 = sshllo.u32 0, 1
    %100 = vst [vmem:[%s1] sm:%s99] %v98

// kernel: double_conv_nchw.1
$region0: #{double_conv_nchw.1}
  #allocation0 [shape = 'u32[]', space=smem, size = 0x4, offset = 0x4, fixed_abs, tag = 'smem constant byte address 0x4 - core index']
  #allocation1 [shape = 'u32[144,128]{1,0:T(1,128)}', space=vmem, size = 0x12000, scoped, tag = 'internal scratch']
  %s0 = inlined_call_operand.vmem [shape: f32[2,16,64], index: 0, kind: input, shape index: {}]
  %s1 = inlined_call_operand.vmem [shape: bf16[3,64,128], index: 1, kind: input, shape index: {}]
  %s2 = inlined_call_operand.vmem [shape: f32[1,128], index: 2, kind: input, shape index: {}]
  %s3 = inlined_call_operand.vmem [shape: bf16[3,128,128], index: 3, kind: input, shape index: {}]
  %s4 = inlined_call_operand.vmem [shape: f32[1,128], index: 4, kind: input, shape index: {}]
  %s5 = inlined_call_operand.vmem [shape: f32[2,16,128], index: 5, kind: output, shape index: {}]
  %s6 = sld [smem:[#allocation0]]
  $region53: #{double_conv_nchw.1} parent=0
    _
  %s8 = ssub.s32 1, %s6
  %s9 = scalar_select 0, %s8, %s6
  loop: start=0, step=1, limit=4
  $region2: #{double_conv_nchw.1} parent=0 // loop_pre_header
    _
  $region3: #{double_conv_nchw.1} parent=0 // loop_header
    %s11 = sphi 0, %s15
    %p12 = scmp.ge.s32.totalorder %s11, 4
    %s21 = sphi 0, %s23
    %s24 = sphi 0, %s21
    %s25 = sphi 0, %s24
    %s41 = sphi 0, %s25
    %s45 = sphi 0, %s45
    %s47 = sphi 0, %s45
    %s48 = sphi 0, %s47
    %s62 = sphi 0, %s48
    %s66 = sphi 0, %s66
    %s68 = sphi 0, %s66
    %s69 = sphi 0, %s68
    %s83 = sphi 0, %s69
    %s87 = sphi 0, %s87
    %s89 = sphi 0, %s87
    %s90 = sphi 0, %s89
    %s104 = sphi 0, %s90
    %s108 = sphi 0, %s108
    %s110 = sphi 0, %s108
    %s111 = sphi 0, %s110
    %s125 = sphi 0, %s111
    %s131 = sphi 0, %s133
    %s134 = sphi 0, %s131
    %s135 = sphi 0, %s134
    %s151 = sphi 0, %s135
  $region4: #{double_conv_nchw.1} parent=0 // loop_header_branch
    %14 = sbr.rel (%p12) target = $region8
  $region5: #{double_conv_nchw.1} parent=0 // loop_body
    %s16 = ssub.s32 %s11, 1
    %s17 = ssub.s32 %s11, 2
    %s18 = sadd.s32 %s11, 1
    %s19 = ssub.s32 %s11, %s18
    %p20 = scmp.eq.s32.totalorder %s19, 0
    %s22 = sadd.s32 %s21, 1
    %s23 = scalar_select %p20, %s21, %s22
    %p26 = pneg %p20
    %p27 = scmp.eq.s32.totalorder %s11, 1
    %p28 = por %p26, %p27
    %p29 = scmp.ne.s32.totalorder %s21, %s24
    %p30 = scmp.eq.s32.totalorder %s11, 0
    %p31 = por %p29, %p30
    %p32 = scmp.ne.s32.totalorder %s21, %s24
    %p33 = scmp.eq.s32.totalorder %s16, 1
    %p34 = por %p32, %p33
    %p35 = scmp.ne.s32.totalorder %s24, %s25
    %p36 = scmp.eq.s32.totalorder %s16, 0
    %p37 = por %p35, %p36
    %p38 = scmp.ne.s32.totalorder %s24, %s25
    %p39 = scmp.eq.s32.totalorder %s17, 1
    %p40 = por %p38, %p39
    %p42 = scmp.ne.s32.totalorder %s25, %s41
    %p43 = scmp.eq.s32.totalorder %s17, 0
    %p44 = por %p42, %p43
    %s46 = sadd.s32 %s45, 1
    %p49 = scmp.eq.s32.totalorder %s11, 1
    %p50 = scmp.ne.s32.totalorder %s45, %s47
    %p51 = scmp.eq.s32.totalorder %s11, 0
    %p52 = por %p50, %p51
    %p53 = scmp.ne.s32.totalorder %s45, %s47
    %p54 = scmp.eq.s32.totalorder %s16, 1
    %p55 = por %p53, %p54
    %p56 = scmp.ne.s32.totalorder %s47, %s48
    %p57 = scmp.eq.s32.totalorder %s16, 0
    %p58 = por %p56, %p57
    %p59 = scmp.ne.s32.totalorder %s47, %s48
    %p60 = scmp.eq.s32.totalorder %s17, 1
    %p61 = por %p59, %p60
    %p63 = scmp.ne.s32.totalorder %s48, %s62
    %p64 = scmp.eq.s32.totalorder %s17, 0
    %p65 = por %p63, %p64
    %s67 = sadd.s32 %s66, 1
    %p70 = scmp.eq.s32.totalorder %s11, 1
    %p71 = scmp.ne.s32.totalorder %s66, %s68
    %p72 = scmp.eq.s32.totalorder %s11, 0
    %p73 = por %p71, %p72
    %p74 = scmp.ne.s32.totalorder %s66, %s68
    %p75 = scmp.eq.s32.totalorder %s16, 1
    %p76 = por %p74, %p75
    %p77 = scmp.ne.s32.totalorder %s68, %s69
    %p78 = scmp.eq.s32.totalorder %s16, 0
    %p79 = por %p77, %p78
    %p80 = scmp.ne.s32.totalorder %s68, %s69
    %p81 = scmp.eq.s32.totalorder %s17, 1
    %p82 = por %p80, %p81
    %p84 = scmp.ne.s32.totalorder %s69, %s83
    %p85 = scmp.eq.s32.totalorder %s17, 0
    %p86 = por %p84, %p85
    %s88 = sadd.s32 %s87, 1
    %p91 = scmp.eq.s32.totalorder %s11, 1
    %p92 = scmp.ne.s32.totalorder %s87, %s89
    %p93 = scmp.eq.s32.totalorder %s11, 0
    %p94 = por %p92, %p93
    %p95 = scmp.ne.s32.totalorder %s87, %s89
    %p96 = scmp.eq.s32.totalorder %s16, 1
    %p97 = por %p95, %p96
    %p98 = scmp.ne.s32.totalorder %s89, %s90
    %p99 = scmp.eq.s32.totalorder %s16, 0
    %p100 = por %p98, %p99
    %p101 = scmp.ne.s32.totalorder %s89, %s90
    %p102 = scmp.eq.s32.totalorder %s17, 1
    %p103 = por %p101, %p102
    %p105 = scmp.ne.s32.totalorder %s90, %s104
    %p106 = scmp.eq.s32.totalorder %s17, 0
    %p107 = por %p105, %p106
    %s109 = sadd.s32 %s108, 1
    %p112 = scmp.eq.s32.totalorder %s11, 1
    %p113 = scmp.ne.s32.totalorder %s108, %s110
    %p114 = scmp.eq.s32.totalorder %s11, 0
    %p115 = por %p113, %p114
    %p116 = scmp.ne.s32.totalorder %s108, %s110
    %p117 = scmp.eq.s32.totalorder %s16, 1
    %p118 = por %p116, %p117
    %p119 = scmp.ne.s32.totalorder %s110, %s111
    %p120 = scmp.eq.s32.totalorder %s16, 0
    %p121 = por %p119, %p120
    %p122 = scmp.ne.s32.totalorder %s110, %s111
    %p123 = scmp.eq.s32.totalorder %s17, 1
    %p124 = por %p122, %p123
    %p126 = scmp.ne.s32.totalorder %s111, %s125
    %p127 = scmp.eq.s32.totalorder %s17, 0
    %p128 = por %p126, %p127
    %s129 = ssub.s32 %s11, %s18
    %p130 = scmp.eq.s32.totalorder %s129, 0
    %s132 = sadd.s32 %s131, 1
    %s133 = scalar_select %p130, %s131, %s132
    %p136 = pneg %p130
    %p137 = scmp.eq.s32.totalorder %s11, 1
    %p138 = por %p136, %p137
    %p139 = scmp.ne.s32.totalorder %s131, %s134
    %p140 = scmp.eq.s32.totalorder %s11, 0
    %p141 = por %p139, %p140
    %p142 = scmp.ne.s32.totalorder %s131, %s134
    %p143 = scmp.eq.s32.totalorder %s16, 1
    %p144 = por %p142, %p143
    %p145 = scmp.ne.s32.totalorder %s134, %s135
    %p146 = scmp.eq.s32.totalorder %s16, 0
    %p147 = por %p145, %p146
    %p148 = scmp.ne.s32.totalorder %s134, %s135
    %p149 = scmp.eq.s32.totalorder %s17, 1
    %p150 = por %p148, %p149
    %p152 = scmp.ne.s32.totalorder %s135, %s151
    %p153 = scmp.eq.s32.totalorder %s17, 0
    %p154 = por %p152, %p153
    %p155 = scmp.le.s32.totalorder 1, %s11
    %p156 = scmp.lt.s32.totalorder %s11, 3
    %p157 = pnand %p155, %p156
    %p158 = pneg %p157
    // Predicated region
    $region9: #{double_conv_nchw.1} parent=5 // pred_check
      _
    $region10: #{double_conv_nchw.1} parent=5 // pred_check_branch
      %160 = sbr.rel (%p157) target = $region12
    $region11: #{double_conv_nchw.1} parent=5 // pred_region
      %s161 = ssub.s32 %s11, 1
      // Predicated region
      $region13: #{double_conv_nchw.1} parent=11 // pred_check
        %p162 = pneg %p58
      $region14: #{double_conv_nchw.1} parent=11 // pred_check_branch
        %164 = sbr.rel (%p162) target = $region16
      $region15: #{double_conv_nchw.1} parent=11 // pred_region
        _
      $region16: #{double_conv_nchw.1} parent=11 // pred_fallthru
        _
      // Predicated region
      $region17: #{double_conv_nchw.1} parent=11 // pred_check
        %p165 = pneg %p79
      $region18: #{double_conv_nchw.1} parent=11 // pred_check_branch
        %167 = sbr.rel (%p165) target = $region20
      $region19: #{double_conv_nchw.1} parent=11 // pred_region
        _
      $region20: #{double_conv_nchw.1} parent=11 // pred_fallthru
        _
      // Predicated region
      $region21: #{double_conv_nchw.1} parent=11 // pred_check
        %p168 = pneg %p100
      $region22: #{double_conv_nchw.1} parent=11 // pred_check_branch
        %170 = sbr.rel (%p168) target = $region24
      $region23: #{double_conv_nchw.1} parent=11 // pred_region
        _
      $region24: #{double_conv_nchw.1} parent=11 // pred_fallthru
        _
      // Predicated region
      $region25: #{double_conv_nchw.1} parent=11 // pred_check
        %p171 = pneg %p121
      $region26: #{double_conv_nchw.1} parent=11 // pred_check_branch
        %173 = sbr.rel (%p171) target = $region28
      $region27: #{double_conv_nchw.1} parent=11 // pred_region
        _
      $region28: #{double_conv_nchw.1} parent=11 // pred_fallthru
        _
    $region12: #{double_conv_nchw.1} parent=5 // pred_fallthru
      _
    %p174 = scmp.lt.s32.totalorder %s11, 2
    // Predicated region
    $region29: #{double_conv_nchw.1} parent=5 // pred_check
      %p175 = pneg %p174
    $region30: #{double_conv_nchw.1} parent=5 // pred_check_branch
      %177 = sbr.rel (%p175) target = $region32
    $region31: #{double_conv_nchw.1} parent=5 // pred_region
      // Predicated region
      $region33: #{double_conv_nchw.1} parent=31 // pred_check
        %p178 = pneg %p31
      $region34: #{double_conv_nchw.1} parent=31 // pred_check_branch
        %180 = sbr.rel (%p178) target = $region36
      $region35: #{double_conv_nchw.1} parent=31 // pred_region
        %p181 = scmp.lt.s32.totalorder %s11, 1
        %s182 = scalar_select %p181, %s11, 1
        %s183 = smul.addr %s182, 2
        %s184 = smul.addr %s183, 8
        %s185 = scalar_lea.vmem %s0, %s184
      $region36: #{double_conv_nchw.1} parent=31 // pred_fallthru
        _
    $region32: #{double_conv_nchw.1} parent=5 // pred_fallthru
      _
    %p186 = scmp.le.s32.totalorder 1, %s11
    %p187 = scmp.lt.s32.totalorder %s11, 3
    %p188 = pnand %p186, %p187
    %p189 = pneg %p188
    // Predicated region
    $region37: #{double_conv_nchw.1} parent=5 // pred_check
      _
    $region38: #{double_conv_nchw.1} parent=5 // pred_check_branch
      %191 = sbr.rel (%p188) target = $region40
    $region39: #{double_conv_nchw.1} parent=5 // pred_region
      %s192 = ssub.s32 %s11, 1
      %p193 = scmp.lt.s32.totalorder %s16, 1
      %s194 = scalar_select %p193, %s16, 1
      %s195 = smul.addr %s194, 2
      %s196 = smul.addr %s195, 8
      %s197 = scalar_lea.vmem %s0, %s196
      %p198 = pneg %p37
      %p199 = pneg %p34
      %p200 = pneg %p58
      %p201 = pneg %p55
      %p202 = pneg %p79
      %p203 = pneg %p76
      %p204 = pneg %p100
      %p205 = pneg %p97
      %p206 = pneg %p121
      %p207 = pneg %p118
      %p208 = pneg %p147
      %p209 = pneg %p144
      %p210 = scmp.lt.s32.totalorder %s16, 1
      %s211 = scalar_select %p210, %s16, 1
      %s212 = smul.addr %s211, 2
      %s213 = smul.addr %s212, 8
      %s214 = scalar_lea.vmem %s5, %s213
      %p215 = scmp.lt.s32.totalorder %s16, 1
      %s216 = scalar_select %p215, %s16, 1
      %s217 = smul.addr %s216, 2
      %s218 = smul.addr %s217, 8
      %s219 = scalar_lea.vmem %s0, %s218
      %p220 = scmp.lt.s32.totalorder %s16, 1
      %s221 = scalar_select %p220, %s16, 1
      %s222 = smul.addr %s221, 2
      %s223 = smul.addr %s222, 8
      %s224 = scalar_lea.vmem %s5, %s223
      %v226 = vld [vmem:[%s219] sm:$0xff]
      %v227 = vld [vmem:[%s219 + $0x8] sm:$0xff]
      %v228 = vld [vmem:[%s2] sm:$0x1]
      %v230 = vlaneseq
      %v231 = vshrl.u32 %v230, 7
      %v232 = vsub.s32 0, %v231
      %v233 = vrot.slane %v228, %v232
      %v235 = vrot.slane %v226, 7
      %v236 = vrot.slane %v227, 7
      %v237 = vlaneseq
      %v238 = vshrl.u32 %v237, 7
      %vm239 = vcmp.lt.s32.totalorder %v238, 1
      %v240 = vsel %vm239, %v235, %v236
      %v241 = vsel %vm239, %v236, %v235
      %v242 = vadd.s32 %v238, 8
      %vm243 = vcmp.ge.s32.totalorder %v238, 1
      %vm244 = vcmp.ge.s32.totalorder %v242, 1
      %v245 = vsel %vm243, %v241, 0.0
      %v246 = vsel %vm244, %v240, 0.0
      %v247 = vpack.c.bf16 %v246, %v245
      %v248 = vld [vmem:[%s1] sm:$0xf]
      %v249 = vld [vmem:[%s1 + $0x4] sm:$0xf]
      %v250 = vld [vmem:[%s1 + $0x8] sm:$0xf]
      %v251 = vld [vmem:[%s1 + $0xc] sm:$0xf]
      %v252 = vld [vmem:[%s1 + $0x10] sm:$0xf]
      %v253 = vld [vmem:[%s1 + $0x14] sm:$0xf]
      %v254 = vld [vmem:[%s1 + $0x18] sm:$0xf]
      %v255 = vld [vmem:[%s1 + $0x1c] sm:$0xf]
      %v264 = vunpack.c.l.b16 %v248
      %v265 = vunpack.c.l.b16 %v249
      %v266 = vunpack.c.l.b16 %v250
      %v267 = vunpack.c.l.b16 %v251
      %v268 = vunpack.c.l.b16 %v252
      %v269 = vunpack.c.l.b16 %v253
      %v270 = vunpack.c.l.b16 %v254
      %v271 = vunpack.c.l.b16 %v255
      %v272 = vpack.c.b16 %v265, %v264
      %v273 = vpack.c.b16 %v267, %v266
      %v274 = vpack.c.b16 %v269, %v268
      %v275 = vpack.c.b16 %v271, %v270
      %vm280 = vcmask 523264
      %v282 = vsel %vm280, %v247, 0
      %284 = vmatprep.subr.bf16.mxu0 0
      %285 = vmatpush1.bf16.msra.mxu0 %v272
      %286 = vmatprep.subr.bf16.mxu0 0
      %287 = vmatpush1.bf16.msra.mxu0 %v273
      %288 = vmatprep.subr.bf16.mxu0 0
      %289 = vmatpush1.bf16.msra.mxu0 %v274
      %290 = vmatprep.subr.bf16.mxu0 0
      %291 = vmatpush1.bf16.msra.mxu0 %v275
      %292 = vmatprep.subr.bf16.mxu0 0
      %293 = vmatpush1.bf16.msra.mxu0 0
      %294 = vmatprep.subr.bf16.mxu0 0
      %295 = vmatpush1.bf16.msra.mxu0 0
      %296 = vmatprep.subr.bf16.mxu0 0
      %297 = vmatpush1.bf16.msra.mxu0 0
      %298 = vmatprep.subr.bf16.mxu0 0
      %299 = vmatpush1.bf16.msra.mxu0 0
      %300 = vmatprep.subr.bf16.mxu0 0
      %301 = vmatpush1.bf16.msra.mxu0 0
      %302 = vmatprep.subr.bf16.mxu0 0
      %303 = vmatpush1.bf16.msra.mxu0 0
      %304 = vmatprep.subr.bf16.mxu0 0
      %305 = vmatpush1.bf16.msra.mxu0 0
      %306 = vmatprep.subr.bf16.mxu0 0
      %307 = vmatpush1.bf16.msra.mxu0 0
      %308 = vmatprep.subr.bf16.mxu0 0
      %309 = vmatpush1.bf16.msra.mxu0 0
      %310 = vmatprep.subr.bf16.mxu0 0
      %311 = vmatpush1.bf16.msra.mxu0 0
      %312 = vmatprep.subr.bf16.mxu0 0
      %313 = vmatpush1.bf16.msra.mxu0 0
      %314 = vmatprep.subr.bf16.mxu0 0
      %315 = vmatpush1.bf16.msra.mxu0 0
      %316 = vmatprep.mubr.bf16.mxu0 0
      %317 = vmatmul.mubr.bf16.gmra.mrb[0].mxu0 %v282
      %v318 = vpop.f32.mrb[0].mxu0
      %v319 = vadd.f32 0.0, %v318
      %v320 = vpop.f32.mrb[0].mxu0
      %v321 = vpop.f32.mrb[0].mxu0
      %v322 = vadd.f32 0.0, %v321
      %v323 = vpop.f32.mrb[0].mxu0
      %324 = vdwg.mxu0
      %v325 = vadd.f32 %v233, %v319
      %v326 = vadd.f32 %v233, %v322
      %v327 = vpack.c.bf16 %v227, %v226
      %s328 = scalar_lea.vmem %s1, 32
      %v329 = vld [vmem:[%s328] sm:$0xf]
      %v330 = vld [vmem:[%s328 + $0x4] sm:$0xf]
      %v331 = vld [vmem:[%s328 + $0x8] sm:$0xf]
      %v332 = vld [vmem:[%s328 + $0xc] sm:$0xf]
      %v333 = vld [vmem:[%s328 + $0x10] sm:$0xf]
      %v334 = vld [vmem:[%s328 + $0x14] sm:$0xf]
      %v335 = vld [vmem:[%s328 + $0x18] sm:$0xf]
      %v336 = vld [vmem:[%s328 + $0x1c] sm:$0xf]
      %v345 = vunpack.c.l.b16 %v329
      %v346 = vunpack.c.l.b16 %v330
      %v347 = vunpack.c.l.b16 %v331
      %v348 = vunpack.c.l.b16 %v332
      %v349 = vunpack.c.l.b16 %v333
      %v350 = vunpack.c.l.b16 %v334
      %v351 = vunpack.c.l.b16 %v335
      %v352 = vunpack.c.l.b16 %v336
      %v353 = vpack.c.b16 %v346, %v345
      %v354 = vpack.c.b16 %v348, %v347
      %v355 = vpack.c.b16 %v350, %v349
      %v356 = vpack.c.b16 %v352, %v351
      %v362 = vsel %vm280, %v327, 0
      %364 = vmatprep.subr.bf16.mxu0 0
      %365 = vmatpush1.bf16.msra.mxu0 %v353
      %366 = vmatprep.subr.bf16.mxu0 0
      %367 = vmatpush1.bf16.msra.mxu0 %v354
      %368 = vmatprep.subr.bf16.mxu0 0
      %369 = vmatpush1.bf16.msra.mxu0 %v355
      %370 = vmatprep.subr.bf16.mxu0 0
      %371 = vmatpush1.bf16.msra.mxu0 %v356
      %372 = vmatprep.subr.bf16.mxu0 0
      %373 = vmatpush1.bf16.msra.mxu0 0
      %374 = vmatprep.subr.bf16.mxu0 0
      %375 = vmatpush1.bf16.msra.mxu0 0
      %376 = vmatprep.subr.bf16.mxu0 0
      %377 = vmatpush1.bf16.msra.mxu0 0
      %378 = vmatprep.subr.bf16.mxu0 0
      %379 = vmatpush1.bf16.msra.mxu0 0
      %380 = vmatprep.subr.bf16.mxu0 0
      %381 = vmatpush1.bf16.msra.mxu0 0
      %382 = vmatprep.subr.bf16.mxu0 0
      %383 = vmatpush1.bf16.msra.mxu0 0
      %384 = vmatprep.subr.bf16.mxu0 0
      %385 = vmatpush1.bf16.msra.mxu0 0
      %386 = vmatprep.subr.bf16.mxu0 0
      %387 = vmatpush1.bf16.msra.mxu0 0
      %388 = vmatprep.subr.bf16.mxu0 0
      %389 = vmatpush1.bf16.msra.mxu0 0
      %390 = vmatprep.subr.bf16.mxu0 0
      %391 = vmatpush1.bf16.msra.mxu0 0
      %392 = vmatprep.subr.bf16.mxu0 0
      %393 = vmatpush1.bf16.msra.mxu0 0
      %394 = vmatprep.subr.bf16.mxu0 0
      %395 = vmatpush1.bf16.msra.mxu0 0
      %396 = vmatprep.mubr.bf16.mxu0 0
      %397 = vmatmul.mubr.bf16.gmra.mrb[0].mxu0 %v362
      %v398 = vpop.f32.mrb[0].mxu0
      %v399 = vadd.f32 0.0, %v398
      %v400 = vpop.f32.mrb[0].mxu0
      %v401 = vpop.f32.mrb[0].mxu0
      %v402 = vadd.f32 0.0, %v401
      %v403 = vpop.f32.mrb[0].mxu0
      %404 = vdwg.mxu0
      %v405 = vadd.f32 %v325, %v399
      %v406 = vadd.f32 %v326, %v402
      %v407 = vrot.slane %v226, 1
      %v408 = vrot.slane %v227, 1
      %vm409 = vcmp.lt.s32.totalorder %v238, 7
      %v410 = vsel %vm409, %v407, %v408
      %v411 = vsel %vm409, %v408, %v407
      %vm412 = vcmp.lt.s32.totalorder %v238, 15
      %vm413 = vcmp.lt.s32.totalorder %v242, 15
      %v414 = vsel %vm412, %v410, 0.0
      %v415 = vsel %vm413, %v411, 0.0
      %v416 = vpack.c.bf16 %v415, %v414
      %s417 = scalar_lea.vmem %s1, 64
      %v418 = vld [vmem:[%s417] sm:$0xf]
      %v419 = vld [vmem:[%s417 + $0x4] sm:$0xf]
      %v420 = vld [vmem:[%s417 + $0x8] sm:$0xf]
      %v421 = vld [vmem:[%s417 + $0xc] sm:$0xf]
      %v422 = vld [vmem:[%s417 + $0x10] sm:$0xf]
      %v423 = vld [vmem:[%s417 + $0x14] sm:$0xf]
      %v424 = vld [vmem:[%s417 + $0x18] sm:$0xf]
      %v425 = vld [vmem:[%s417 + $0x1c] sm:$0xf]
      %v434 = vunpack.c.l.b16 %v418
      %v435 = vunpack.c.l.b16 %v419
      %v436 = vunpack.c.l.b16 %v420
      %v437 = vunpack.c.l.b16 %v421
      %v438 = vunpack.c.l.b16 %v422
      %v439 = vunpack.c.l.b16 %v423
      %v440 = vunpack.c.l.b16 %v424
      %v441 = vunpack.c.l.b16 %v425
      %v442 = vpack.c.b16 %v435, %v434
      %v443 = vpack.c.b16 %v437, %v436
      %v444 = vpack.c.b16 %v439, %v438
      %v445 = vpack.c.b16 %v441, %v440
      %v451 = vsel %vm280, %v416, 0
      %453 = vmatprep.subr.bf16.mxu0 0
      %454 = vmatpush1.bf16.msra.mxu0 %v442
      %455 = vmatprep.subr.bf16.mxu0 0
      %456 = vmatpush1.bf16.msra.mxu0 %v443
      %457 = vmatprep.subr.bf16.mxu0 0
      %458 = vmatpush1.bf16.msra.mxu0 %v444
      %459 = vmatprep.subr.bf16.mxu0 0
      %460 = vmatpush1.bf16.msra.mxu0 %v445
      %461 = vmatprep.subr.bf16.mxu0 0
      %462 = vmatpush1.bf16.msra.mxu0 0
      %463 = vmatprep.subr.bf16.mxu0 0
      %464 = vmatpush1.bf16.msra.mxu0 0
      %465 = vmatprep.subr.bf16.mxu0 0
      %466 = vmatpush1.bf16.msra.mxu0 0
      %467 = vmatprep.subr.bf16.mxu0 0
      %468 = vmatpush1.bf16.msra.mxu0 0
      %469 = vmatprep.subr.bf16.mxu0 0
      %470 = vmatpush1.bf16.msra.mxu0 0
      %471 = vmatprep.subr.bf16.mxu0 0
      %472 = vmatpush1.bf16.msra.mxu0 0
      %473 = vmatprep.subr.bf16.mxu0 0
      %474 = vmatpush1.bf16.msra.mxu0 0
      %475 = vmatprep.subr.bf16.mxu0 0
      %476 = vmatpush1.bf16.msra.mxu0 0
      %477 = vmatprep.subr.bf16.mxu0 0
      %478 = vmatpush1.bf16.msra.mxu0 0
      %479 = vmatprep.subr.bf16.mxu0 0
      %480 = vmatpush1.bf16.msra.mxu0 0
      %481 = vmatprep.subr.bf16.mxu0 0
      %482 = vmatpush1.bf16.msra.mxu0 0
      %483 = vmatprep.subr.bf16.mxu0 0
      %484 = vmatpush1.bf16.msra.mxu0 0
      %485 = vmatprep.mubr.bf16.mxu0 0
      %486 = vmatmul.mubr.bf16.gmra.mrb[0].mxu0 %v451
      %v487 = vpop.f32.mrb[0].mxu0
      %v488 = vadd.f32 0.0, %v487
      %v489 = vpop.f32.mrb[0].mxu0
      %v490 = vpop.f32.mrb[0].mxu0
      %v491 = vadd.f32 0.0, %v490
      %v492 = vpop.f32.mrb[0].mxu0
      %493 = vdwg.mxu0
      %v494 = vadd.f32 %v405, %v488
      %v495 = vadd.f32 %v406, %v491
      %v496 = vmax.f32 %v494, 0.0
      %v497 = vmax.f32 %v495, 0.0
      %v498 = vld [vmem:[%s4] sm:$0x1]
      %v500 = vlaneseq
      %v501 = vshrl.u32 %v500, 7
      %v502 = vsub.s32 0, %v501
      %v503 = vrot.slane %v498, %v502
      %v505 = vrot.slane %v496, 7
      %v506 = vrot.slane %v497, 7
      %v507 = vsel %vm239, %v505, %v506
      %v508 = vsel %vm239, %v506, %v505
      %v509 = vsel %vm243, %v508, 0.0
      %v510 = vsel %vm244, %v507, 0.0
      %v511 = vpack.c.bf16 %v510, %v509
      %v512 = vld [vmem:[%s3] sm:$0xf]
      %v513 = vld [vmem:[%s3 + $0x4] sm:$0xf]
      %v514 = vld [vmem:[%s3 + $0x8] sm:$0xf]
      %v515 = vld [vmem:[%s3 + $0xc] sm:$0xf]
      %v516 = vld [vmem:[%s3 + $0x10] sm:$0xf]
      %v517 = vld [vmem:[%s3 + $0x14] sm:$0xf]
      %v518 = vld [vmem:[%s3 + $0x18] sm:$0xf]
      %v519 = vld [vmem:[%s3 + $0x1c] sm:$0xf]
      %v520 = vld [vmem:[%s3 + $0x20] sm:$0xf]
      %v521 = vld [vmem:[%s3 + $0x24] sm:$0xf]
      %v522 = vld [vmem:[%s3 + $0x28] sm:$0xf]
      %v523 = vld [vmem:[%s3 + $0x2c] sm:$0xf]
      %v524 = vld [vmem:[%s3 + $0x30] sm:$0xf]
      %v525 = vld [vmem:[%s3 + $0x34] sm:$0xf]
      %v526 = vld [vmem:[%s3 + $0x38] sm:$0xf]
      %v527 = vld [vmem:[%s3 + $0x3c] sm:$0xf]
      %v544 = vunpack.c.l.b16 %v512
      %v545 = vunpack.c.l.b16 %v513
      %v546 = vunpack.c.l.b16 %v514
      %v547 = vunpack.c.l.b16 %v515
      %v548 = vunpack.c.l.b16 %v516
      %v549 = vunpack.c.l.b16 %v517
      %v550 = vunpack.c.l.b16 %v518
      %v551 = vunpack.c.l.b16 %v519
      %v552 = vunpack.c.l.b16 %v520
      %v553 = vunpack.c.l.b16 %v521
      %v554 = vunpack.c.l.b16 %v522
      %v555 = vunpack.c.l.b16 %v523
      %v556 = vunpack.c.l.b16 %v524
      %v557 = vunpack.c.l.b16 %v525
      %v558 = vunpack.c.l.b16 %v526
      %v559 = vunpack.c.l.b16 %v527
      %v560 = vpack.c.b16 %v545, %v544
      %v561 = vpack.c.b16 %v547, %v546
      %v562 = vpack.c.b16 %v549, %v548
      %v563 = vpack.c.b16 %v551, %v550
      %v564 = vpack.c.b16 %v553, %v552
      %v565 = vpack.c.b16 %v555, %v554
      %v566 = vpack.c.b16 %v557, %v556
      %v567 = vpack.c.b16 %v559, %v558
      %576 = vmatprep.subr.bf16.mxu0 0
      %577 = vmatpush1.bf16.msra.mxu0 %v560
      %578 = vmatprep.subr.bf16.mxu0 0
      %579 = vmatpush1.bf16.msra.mxu0 %v561
      %580 = vmatprep.subr.bf16.mxu0 0
      %581 = vmatpush1.bf16.msra.mxu0 %v562
      %582 = vmatprep.subr.bf16.mxu0 0
      %583 = vmatpush1.bf16.msra.mxu0 %v563
      %584 = vmatprep.subr.bf16.mxu0 0
      %585 = vmatpush1.bf16.msra.mxu0 %v564
      %586 = vmatprep.subr.bf16.mxu0 0
      %587 = vmatpush1.bf16.msra.mxu0 %v565
      %588 = vmatprep.subr.bf16.mxu0 0
      %589 = vmatpush1.bf16.msra.mxu0 %v566
      %590 = vmatprep.subr.bf16.mxu0 0
      %591 = vmatpush1.bf16.msra.mxu0 %v567
      %592 = vmatprep.subr.bf16.mxu0 0
      %593 = vmatpush1.bf16.msra.mxu0 0
      %594 = vmatprep.subr.bf16.mxu0 0
      %595 = vmatpush1.bf16.msra.mxu0 0
      %596 = vmatprep.subr.bf16.mxu0 0
      %597 = vmatpush1.bf16.msra.mxu0 0
      %598 = vmatprep.subr.bf16.mxu0 0
      %599 = vmatpush1.bf16.msra.mxu0 0
      %600 = vmatprep.subr.bf16.mxu0 0
      %601 = vmatpush1.bf16.msra.mxu0 0
      %602 = vmatprep.subr.bf16.mxu0 0
      %603 = vmatpush1.bf16.msra.mxu0 0
      %604 = vmatprep.subr.bf16.mxu0 0
      %605 = vmatpush1.bf16.msra.mxu0 0
      %606 = vmatprep.subr.bf16.mxu0 0
      %607 = vmatpush1.bf16.msra.mxu0 0
      %608 = vmatprep.mubr.bf16.mxu0 0
      %609 = vmatmul.mubr.bf16.gmra.mrb[0].mxu0 %v511
      %v610 = vpop.f32.mrb[0].mxu0
      %v611 = vadd.f32 0.0, %v610
      %v612 = vpop.f32.mrb[0].mxu0
      %v613 = vpop.f32.mrb[0].mxu0
      %v614 = vadd.f32 0.0, %v613
      %v615 = vpop.f32.mrb[0].mxu0
      %616 = vdwg.mxu0
      %v617 = vadd.f32 %v503, %v611
      %v618 = vadd.f32 %v503, %v614
      %v619 = vpack.c.bf16 %v497, %v496
      %s620 = scalar_lea.vmem %s3, 64
      %v621 = vld [vmem:[%s620] sm:$0xf]
      %v622 = vld [vmem:[%s620 + $0x4] sm:$0xf]
      %v623 = vld [vmem:[%s620 + $0x8] sm:$0xf]
      %v624 = vld [vmem:[%s620 + $0xc] sm:$0xf]
      %v625 = vld [vmem:[%s620 + $0x10] sm:$0xf]
      %v626 = vld [vmem:[%s620 + $0x14] sm:$0xf]
      %v627 = vld [vmem:[%s620 + $0x18] sm:$0xf]
      %v628 = vld [vmem:[%s620 + $0x1c] sm:$0xf]
      %v629 = vld [vmem:[%s620 + $0x20] sm:$0xf]
      %v630 = vld [vmem:[%s620 + $0x24] sm:$0xf]
      %v631 = vld [vmem:[%s620 + $0x28] sm:$0xf]
      %v632 = vld [vmem:[%s620 + $0x2c] sm:$0xf]
      %v633 = vld [vmem:[%s620 + $0x30] sm:$0xf]
      %v634 = vld [vmem:[%s620 + $0x34] sm:$0xf]
      %v635 = vld [vmem:[%s620 + $0x38] sm:$0xf]
      %v636 = vld [vmem:[%s620 + $0x3c] sm:$0xf]
      %v653 = vunpack.c.l.b16 %v621
      %v654 = vunpack.c.l.b16 %v622
      %v655 = vunpack.c.l.b16 %v623
      %v656 = vunpack.c.l.b16 %v624
      %v657 = vunpack.c.l.b16 %v625
      %v658 = vunpack.c.l.b16 %v626
      %v659 = vunpack.c.l.b16 %v627
      %v660 = vunpack.c.l.b16 %v628
      %v661 = vunpack.c.l.b16 %v629
      %v662 = vunpack.c.l.b16 %v630
      %v663 = vunpack.c.l.b16 %v631
      %v664 = vunpack.c.l.b16 %v632
      %v665 = vunpack.c.l.b16 %v633
      %v666 = vunpack.c.l.b16 %v634
      %v667 = vunpack.c.l.b16 %v635
      %v668 = vunpack.c.l.b16 %v636
      %v669 = vpack.c.b16 %v654, %v653
      %v670 = vpack.c.b16 %v656, %v655
      %v671 = vpack.c.b16 %v658, %v657
      %v672 = vpack.c.b16 %v660, %v659
      %v673 = vpack.c.b16 %v662, %v661
      %v674 = vpack.c.b16 %v664, %v663
      %v675 = vpack.c.b16 %v666, %v665
      %v676 = vpack.c.b16 %v668, %v667
      %685 = vmatprep.subr.bf16.mxu0 0
      %686 = vmatpush1.bf16.msra.mxu0 %v669
      %687 = vmatprep.subr.bf16.mxu0 0
      %688 = vmatpush1.bf16.msra.mxu0 %v670
      %689 = vmatprep.subr.bf16.mxu0 0
      %690 = vmatpush1.bf16.msra.mxu0 %v671
      %691 = vmatprep.subr.bf16.mxu0 0
      %692 = vmatpush1.bf16.msra.mxu0 %v672
      %693 = vmatprep.subr.bf16.mxu0 0
      %694 = vmatpush1.bf16.msra.mxu0 %v673
      %695 = vmatprep.subr.bf16.mxu0 0
      %696 = vmatpush1.bf16.msra.mxu0 %v674
      %697 = vmatprep.subr.bf16.mxu0 0
      %698 = vmatpush1.bf16.msra.mxu0 %v675
      %699 = vmatprep.subr.bf16.mxu0 0
      %700 = vmatpush1.bf16.msra.mxu0 %v676
      %701 = vmatprep.subr.bf16.mxu0 0
      %702 = vmatpush1.bf16.msra.mxu0 0
      %703 = vmatprep.subr.bf16.mxu0 0
      %704 = vmatpush1.bf16.msra.mxu0 0
      %705 = vmatprep.subr.bf16.mxu0 0
      %706 = vmatpush1.bf16.msra.mxu0 0
      %707 = vmatprep.subr.bf16.mxu0 0
      %708 = vmatpush1.bf16.msra.mxu0 0
      %709 = vmatprep.subr.bf16.mxu0 0
      %710 = vmatpush1.bf16.msra.mxu0 0
      %711 = vmatprep.subr.bf16.mxu0 0
      %712 = vmatpush1.bf16.msra.mxu0 0
      %713 = vmatprep.subr.bf16.mxu0 0
      %714 = vmatpush1.bf16.msra.mxu0 0
      %715 = vmatprep.subr.bf16.mxu0 0
      %716 = vmatpush1.bf16.msra.mxu0 0
      %717 = vmatprep.mubr.bf16.mxu0 0
      %718 = vmatmul.mubr.bf16.gmra.mrb[0].mxu0 %v619
      %v719 = vpop.f32.mrb[0].mxu0
      %v720 = vadd.f32 0.0, %v719
      %v721 = vpop.f32.mrb[0].mxu0
      %v722 = vpop.f32.mrb[0].mxu0
      %v723 = vadd.f32 0.0, %v722
      %v724 = vpop.f32.mrb[0].mxu0
      %725 = vdwg.mxu0
      %v726 = vadd.f32 %v617, %v720
      %v727 = vadd.f32 %v618, %v723
      %v728 = vrot.slane %v496, 1
      %v729 = vrot.slane %v497, 1
      %v730 = vsel %vm409, %v728, %v729
      %v731 = vsel %vm409, %v729, %v728
      %v732 = vsel %vm412, %v730, 0.0
      %v733 = vsel %vm413, %v731, 0.0
      %v734 = vpack.c.bf16 %v733, %v732
      %s735 = scalar_lea.vmem %s3, 128
      %v736 = vld [vmem:[%s735] sm:$0xf]
      %v737 = vld [vmem:[%s735 + $0x4] sm:$0xf]
      %v738 = vld [vmem:[%s735 + $0x8] sm:$0xf]
      %v739 = vld [vmem:[%s735 + $0xc] sm:$0xf]
      %v740 = vld [vmem:[%s735 + $0x10] sm:$0xf]
      %v741 = vld [vmem:[%s735 + $0x14] sm:$0xf]
      %v742 = vld [vmem:[%s735 + $0x18] sm:$0xf]
      %v743 = vld [vmem:[%s735 + $0x1c] sm:$0xf]
      %v744 = vld [vmem:[%s735 + $0x20] sm:$0xf]
      %v745 = vld [vmem:[%s735 + $0x24] sm:$0xf]
      %v746 = vld [vmem:[%s735 + $0x28] sm:$0xf]
      %v747 = vld [vmem:[%s735 + $0x2c] sm:$0xf]
      %v748 = vld [vmem:[%s735 + $0x30] sm:$0xf]
      %v749 = vld [vmem:[%s735 + $0x34] sm:$0xf]
      %v750 = vld [vmem:[%s735 + $0x38] sm:$0xf]
      %v751 = vld [vmem:[%s735 + $0x3c] sm:$0xf]
      %v768 = vunpack.c.l.b16 %v736
      %v769 = vunpack.c.l.b16 %v737
      %v770 = vunpack.c.l.b16 %v738
      %v771 = vunpack.c.l.b16 %v739
      %v772 = vunpack.c.l.b16 %v740
      %v773 = vunpack.c.l.b16 %v741
      %v774 = vunpack.c.l.b16 %v742
      %v775 = vunpack.c.l.b16 %v743
      %v776 = vunpack.c.l.b16 %v744
      %v777 = vunpack.c.l.b16 %v745
      %v778 = vunpack.c.l.b16 %v746
      %v779 = vunpack.c.l.b16 %v747
      %v780 = vunpack.c.l.b16 %v748
      %v781 = vunpack.c.l.b16 %v749
      %v782 = vunpack.c.l.b16 %v750
      %v783 = vunpack.c.l.b16 %v751
      %v784 = vpack.c.b16 %v769, %v768
      %v785 = vpack.c.b16 %v771, %v770
      %v786 = vpack.c.b16 %v773, %v772
      %v787 = vpack.c.b16 %v775, %v774
      %v788 = vpack.c.b16 %v777, %v776
      %v789 = vpack.c.b16 %v779, %v778
      %v790 = vpack.c.b16 %v781, %v780
      %v791 = vpack.c.b16 %v783, %v782
      %800 = vmatprep.subr.bf16.mxu0 0
      %801 = vmatpush1.bf16.msra.mxu0 %v784
      %802 = vmatprep.subr.bf16.mxu0 0
      %803 = vmatpush1.bf16.msra.mxu0 %v785
      %804 = vmatprep.subr.bf16.mxu0 0
      %805 = vmatpush1.bf16.msra.mxu0 %v786
      %806 = vmatprep.subr.bf16.mxu0 0
      %807 = vmatpush1.bf16.msra.mxu0 %v787
      %808 = vmatprep.subr.bf16.mxu0 0
      %809 = vmatpush1.bf16.msra.mxu0 %v788
      %810 = vmatprep.subr.bf16.mxu0 0
      %811 = vmatpush1.bf16.msra.mxu0 %v789
      %812 = vmatprep.subr.bf16.mxu0 0
      %813 = vmatpush1.bf16.msra.mxu0 %v790
      %814 = vmatprep.subr.bf16.mxu0 0
      %815 = vmatpush1.bf16.msra.mxu0 %v791
      %816 = vmatprep.subr.bf16.mxu0 0
      %817 = vmatpush1.bf16.msra.mxu0 0
      %818 = vmatprep.subr.bf16.mxu0 0
      %819 = vmatpush1.bf16.msra.mxu0 0
      %820 = vmatprep.subr.bf16.mxu0 0
      %821 = vmatpush1.bf16.msra.mxu0 0
      %822 = vmatprep.subr.bf16.mxu0 0
      %823 = vmatpush1.bf16.msra.mxu0 0
      %824 = vmatprep.subr.bf16.mxu0 0
      %825 = vmatpush1.bf16.msra.mxu0 0
      %826 = vmatprep.subr.bf16.mxu0 0
      %827 = vmatpush1.bf16.msra.mxu0 0
      %828 = vmatprep.subr.bf16.mxu0 0
      %829 = vmatpush1.bf16.msra.mxu0 0
      %830 = vmatprep.subr.bf16.mxu0 0
      %831 = vmatpush1.bf16.msra.mxu0 0
      %832 = vmatprep.mubr.bf16.mxu0 0
      %833 = vmatmul.mubr.bf16.gmra.mrb[0].mxu0 %v734
      %v834 = vpop.f32.mrb[0].mxu0
      %v835 = vadd.f32 0.0, %v834
      %v836 = vpop.f32.mrb[0].mxu0
      %v837 = vpop.f32.mrb[0].mxu0
      %v838 = vadd.f32 0.0, %v837
      %v839 = vpop.f32.mrb[0].mxu0
      %840 = vdwg.mxu0
      %v841 = vadd.f32 %v726, %v835
      %v842 = vadd.f32 %v727, %v838
      %v843 = vmax.f32 %v841, 0.0
      %v844 = vmax.f32 %v842, 0.0
      %845 = vst [vmem:[%s224] sm:$0xff] %v843
      %846 = vst [vmem:[%s224 + $0x8] sm:$0xff] %v844
      %p847 = scmp.lt.s32.totalorder %s16, 1
      %s848 = scalar_select %p847, %s16, 1
      %s849 = smul.addr %s848, 2
      %s850 = smul.addr %s849, 8
      %s851 = scalar_lea.vmem %s5, %s850
      // Predicated region
      $region41: #{double_conv_nchw.1} parent=39 // pred_check
        %p852 = pneg %p144
      $region42: #{double_conv_nchw.1} parent=39 // pred_check_branch
        %854 = sbr.rel (%p852) target = $region44
      $region43: #{double_conv_nchw.1} parent=39 // pred_region
        _
      $region44: #{double_conv_nchw.1} parent=39 // pred_fallthru
        _
    $region40: #{double_conv_nchw.1} parent=5 // pred_fallthru
      _
    %p855 = scmp.le.s32.totalorder 2, %s11
    // Predicated region
    $region45: #{double_conv_nchw.1} parent=5 // pred_check
      %p856 = pneg %p855
    $region46: #{double_conv_nchw.1} parent=5 // pred_check_branch
      %858 = sbr.rel (%p856) target = $region48
    $region47: #{double_conv_nchw.1} parent=5 // pred_region
      %s859 = ssub.s32 %s11, 2
      // Predicated region
      $region49: #{double_conv_nchw.1} parent=47 // pred_check
        %p860 = pneg %p150
      $region50: #{double_conv_nchw.1} parent=47 // pred_check_branch
        %862 = sbr.rel (%p860) target = $region52
      $region51: #{double_conv_nchw.1} parent=47 // pred_region
        %p863 = scmp.lt.s32.totalorder %s17, 1
        %s864 = scalar_select %p863, %s17, 1
        %s865 = smul.addr %s864, 2
        %s866 = smul.addr %s865, 8
        %s867 = scalar_lea.vmem %s5, %s866
      $region52: #{double_conv_nchw.1} parent=47 // pred_fallthru
        _
    $region48: #{double_conv_nchw.1} parent=5 // pred_fallthru
      _
  $region6: #{double_conv_nchw.1} parent=0 // loop_footer
    %s15 = sadd.s32 1, %s11
  $region7: #{double_conv_nchw.1} parent=0 // loop_footer_branch
    %10 = sbr.rel target = $region3
  $region8: #{double_conv_nchw.1} parent=0 // loop_exit
    _

</llo_original>
